<compile_context>
chip_gen: v7x
topology: tpu7x:2x2x1
jax: 0.10.0
libtpu: 0.0.40
codegen_flags: <defaults>
</compile_context>

<pallas_src>
import functools
import math

import jax
import jax.numpy as jnp
from jax.experimental import pallas as pl
from jax.experimental.pallas import tpu as pltpu

_LANE = 128


def _round_up(x, m):
    return ((x + m - 1) // m) * m


# --------------------------------------------------------------------------- #
# Kernel
# --------------------------------------------------------------------------- #
def _policy_gradient_rollout_kernel(
    x_ref,      # (Bb, I)       current-timestep input slice (T dim squeezed)
    h0_ref,     # (Bb, Hp)      initial hidden state for this batch shard
    wi3_ref,    # (I, 3*Hp)     fused input->hidden weights, gate order r|z|n
    wh3_ref,    # (Hp, 3*Hp)    fused hidden->hidden weights, gate order r|z|n
    brz_ref,    # (1, 2*Hp)     pre-summed r/z biases (b_ir+b_hr | b_iz+b_hz)
    bin_ref,    # (1, Hp)       b_in
    bhn_ref,    # (1, Hp)       b_hn (applied inside r * (h @ Whn + bhn))
    wout_ref,   # (Hp, O)
    bout_ref,   # (1, O)
    outs_ref,   # (Bb, O)       current-timestep softmax output (T dim squeezed)
    hlast_ref,  # (Bb, Hp)      hidden state after the last step of this shard
    h_scratch,  # VMEM (Bb, Hp) f32 — hidden state carried across timesteps
    *,
    matmul_dtype,
):
    t = pl.program_id(1)

    @pl.when(t == 0)
    def _():
        h_scratch[...] = h0_ref[...]

    hp = h_scratch.shape[-1]
    h = h_scratch[...]
    x = x_ref[...]

    # Two fused GRU matmuls (r|z|n along the lane axis) + one output matmul,
    # bf16 MXU operands if requested, f32 accumulation always.
    gi = jnp.dot(x.astype(matmul_dtype), wi3_ref[...],
                 preferred_element_type=jnp.float32)            # (Bb, 3Hp)
    gh = jnp.dot(h.astype(matmul_dtype), wh3_ref[...],
                 preferred_element_type=jnp.float32)            # (Bb, 3Hp)

    # Gate columns are padded to 128-lane boundaries, so every slice below is a
    # whole-vreg select (no cross-lane shuffles on the XLU).
    rz = jax.nn.sigmoid(gi[:, : 2 * hp] + gh[:, : 2 * hp] + brz_ref[...])
    r = rz[:, :hp]
    z = rz[:, hp:]
    n = jnp.tanh(gi[:, 2 * hp:] + bin_ref[...] + r * (gh[:, 2 * hp:] + bhn_ref[...]))

    h_next = (1.0 - z) * n + z * h
    h_scratch[...] = h_next
    hlast_ref[...] = h_next.astype(hlast_ref.dtype)   # copied back once per shard

    # Output layer + softmax (exact normalization: this kernel is not EUP-bound).
    # Note: O is small, so this per-step store is a masked (non-lane-dense) vst;
    # packing several timesteps per store would be the next store-side lever.
    prefs = jnp.dot(h_next.astype(matmul_dtype), wout_ref[...],
                    preferred_element_type=jnp.float32) + bout_ref[...]
    m = jnp.max(prefs, axis=-1, keepdims=True)
    e = jnp.exp(prefs - m)
    outs_ref[...] = (e / jnp.sum(e, axis=-1, keepdims=True)).astype(outs_ref.dtype)


# --------------------------------------------------------------------------- #
# Wrappers
# --------------------------------------------------------------------------- #
def policy_gradient_rollout(xs, h0, params, *, batch_block=None):
    """Run the GRUCell+Linear+softmax cell over a whole rollout in ONE pallas_call.

    xs: (T, B, I) inputs, h0: (B, H) initial hidden state.
    Returns (outs (T, B, O), h_last (B, H)).
    """
    T, B, I = xs.shape
    H = h0.shape[1]
    Hp = params["w_h3"].shape[0]
    O = params["w_out"].shape[1]
    matmul_dtype = params["w_i3"].dtype

    if batch_block is None:
        batch_block = B
    assert B % batch_block == 0, "batch must divide evenly into batch_block shards"
    n_shards = B // batch_block
    Bb = batch_block

    # Zero-pad h0 to the lane-padded hidden width; padded lanes stay exactly 0
    # through the recurrence because the corresponding weight rows/cols are 0.
    h0p = jnp.pad(h0.astype(jnp.float32), ((0, 0), (0, Hp - H)))

    weights = (params["w_i3"], params["w_h3"], params["b_rz"],
               params["b_in"], params["b_hn"], params["w_out"], params["b_out"])

    def const_spec(shape):  # weight stays in the same VMEM block for the whole call
        return pl.BlockSpec(shape, lambda s, t: (0,) * len(shape))

    in_specs = [
        pl.BlockSpec((None, Bb, I), lambda s, t: (t, s, 0)),    # x: streamed per step
        pl.BlockSpec((Bb, Hp), lambda s, t: (s, 0)),            # h0: per batch shard
        const_spec((I, 3 * Hp)),
        const_spec((Hp, 3 * Hp)),
        const_spec((1, 2 * Hp)),
        const_spec((1, Hp)),
        const_spec((1, Hp)),
        const_spec((Hp, O)),
        const_spec((1, O)),
    ]
    out_specs = (
        pl.BlockSpec((None, Bb, O), lambda s, t: (t, s, 0)),    # outs: streamed per step
        pl.BlockSpec((Bb, Hp), lambda s, t: (s, 0)),            # final hidden per shard
    )
    out_shape = (
        jax.ShapeDtypeStruct((T, B, O), jnp.float32),
        jax.ShapeDtypeStruct((B, Hp), jnp.float32),
    )

    # Advisory cost estimate so XLA can overlap surrounding HLO with this call.
    mm_flops = 2 * B * I * 3 * Hp + 2 * B * Hp * 3 * Hp + 2 * B * Hp * O
    weight_bytes = sum(math.prod(w.shape) * w.dtype.itemsize for w in weights)
    cost = pl.CostEstimate(
        flops=T * (mm_flops + 12 * B * Hp),
        transcendentals=T * B * (3 * Hp + O),
        bytes_accessed=weight_bytes + T * B * (I + O) * 4 + 2 * B * Hp * 4,
    )

    kernel = functools.partial(_policy_gradient_rollout_kernel,
                               matmul_dtype=matmul_dtype)

    outs, h_last = pl.pallas_call(
        kernel,
        grid_spec=pltpu.PrefetchScalarGridSpec(
            num_scalar_prefetch=0,
            grid=(n_shards, T),
            in_specs=in_specs,
            out_specs=out_specs,
            scratch_shapes=[pltpu.VMEM((Bb, Hp), jnp.float32)],
        ),
        out_shape=out_shape,
        compiler_params=pltpu.CompilerParams(
            # T is a true recurrence -> "arbitrary"; batch shards are independent
            # -> "parallel" (lets v7x split them across its 2 TensorCores; plain
            # serial loop on single-core v5e/v6e).
            dimension_semantics=("parallel", "arbitrary"),
        ),
        cost_estimate=cost,
    )(xs, h0p, *weights)

    return outs, h_last[:, :H]


def policy_gradient_forward(x, h_prev, params):
    """Single-step forward matching PolicyGradient.forward: returns (outs, h_next)."""
    outs, h_next = policy_gradient_rollout(x[None], h_prev, params)
    return outs[0], h_next


# --------------------------------------------------------------------------- #
# Parameter init / packing (torch reset_parameters layout -> fused kernel layout)
# --------------------------------------------------------------------------- #
def init_raw_params(key, input_size, hidden_size, output_size):
    """torch-layout parameters with reset_parameters()-style uniform(-1/sqrt(H), 1/sqrt(H))."""
    ks = jax.random.split(key, 6)
    bound = 1.0 / math.sqrt(hidden_size)
    u = lambda k, shape: jax.random.uniform(k, shape, jnp.float32, -bound, bound)
    return {
        "w_ih": u(ks[0], (3 * hidden_size, input_size)),    # GRUCell.weight_ih
        "w_hh": u(ks[1], (3 * hidden_size, hidden_size)),   # GRUCell.weight_hh
        "b_ih": u(ks[2], (3 * hidden_size,)),
        "b_hh": u(ks[3], (3 * hidden_size,)),
        "w_lin": u(ks[4], (output_size, hidden_size)),      # Linear.weight
        "b_lin": u(ks[5], (output_size,)),
    }


def pack_params(raw, *, matmul_dtype=jnp.float32, lane=_LANE):
    """Pack torch-layout GRUCell/Linear weights for the fused kernel:
      - gates fused along the lane axis (order r|z|n),
      - each gate's H columns zero-padded to Hp = round_up(H, 128),
      - r/z biases pre-summed; b_in / b_hn kept separate (b_hn sits inside
        r * (h @ Whn + bhn)),
      - matmul operands optionally stored in bf16 (f32 accumulation in-kernel).
    """
    w_ih, w_hh = raw["w_ih"], raw["w_hh"]
    b_ih, b_hh = raw["b_ih"], raw["b_hh"]
    w_lin, b_lin = raw["w_lin"], raw["b_lin"]

    H = w_hh.shape[1]
    O = w_lin.shape[0]
    Hp = _round_up(H, lane)

    def pad_gate_cols(w):                       # (rows, 3H) -> (rows, 3Hp)
        gates = [w[:, g * H:(g + 1) * H] for g in range(3)]
        gates = [jnp.pad(g, ((0, 0), (0, Hp - H))) for g in gates]
        return jnp.concatenate(gates, axis=1)

    def pad_vec(v):                             # (H,) -> (Hp,)
        return jnp.pad(v, (0, Hp - H))

    w_i3 = pad_gate_cols(w_ih.T)                                    # (I, 3Hp)
    w_h3 = pad_gate_cols(jnp.pad(w_hh.T, ((0, Hp - H), (0, 0))))    # (Hp, 3Hp)
    b_rz = jnp.concatenate(
        [pad_vec(b_ih[:H] + b_hh[:H]),
         pad_vec(b_ih[H:2 * H] + b_hh[H:2 * H])]).reshape(1, 2 * Hp)
    w_out = jnp.pad(w_lin.T, ((0, Hp - H), (0, 0)))                 # (Hp, O)

    return {
        "w_i3": w_i3.astype(matmul_dtype),
        "w_h3": w_h3.astype(matmul_dtype),
        "b_rz": b_rz.astype(jnp.float32),
        "b_in": pad_vec(b_ih[2 * H:]).reshape(1, Hp).astype(jnp.float32),
        "b_hn": pad_vec(b_hh[2 * H:]).reshape(1, Hp).astype(jnp.float32),
        "w_out": w_out.astype(matmul_dtype),
        "b_out": b_lin.reshape(1, O).astype(jnp.float32),
    }


# --------------------------------------------------------------------------- #
# Pure-JAX references (from the raw torch-layout weights)
# --------------------------------------------------------------------------- #
def reference_step(x, h, raw):
    H = h.shape[1]
    gi = x @ raw["w_ih"].T + raw["b_ih"]
    gh = h @ raw["w_hh"].T + raw["b_hh"]
    r = jax.nn.sigmoid(gi[:, :H] + gh[:, :H])
    z = jax.nn.sigmoid(gi[:, H:2 * H] + gh[:, H:2 * H])
    n = jnp.tanh(gi[:, 2 * H:] + r * gh[:, 2 * H:])
    h_next = (1.0 - z) * n + z * h
    prefs = h_next @ raw["w_lin"].T + raw["b_lin"]
    return jax.nn.softmax(prefs, axis=-1), h_next


def reference_rollout(xs, h0, raw):
    outs, h = [], h0
    for t in range(xs.shape[0]):
        o, h = reference_step(xs[t], h, raw)
        outs.append(o)
    return jnp.stack(outs), h


# --------------------------------------------------------------------------- #
# Self-test
# --------------------------------------------------------------------------- #
if __name__ == "__main__":
    # Small shapes consistent with PolicyGradient(input_size, output_size, hidden_size)
    # driven over a short rollout; batch raised to a multiple of 8 sublanes.
    batch, input_size, hidden_size, output_size, seq = 16, 4, 32, 8, 8

    key = jax.random.PRNGKey(0)
    k_param, k_x, k_h = jax.random.split(key, 3)

    raw = init_raw_params(k_param, input_size, hidden_size, output_size)
    xs = jax.random.normal(k_x, (seq, batch, input_size), jnp.float32)
    h0 = jax.random.normal(k_h, (batch, hidden_size), jnp.float32)

    outs_ref, h_ref = reference_rollout(xs, h0, raw)

    # --- f32 MXU operands: fused T-step rollout, 2 batch shards -------------
    params_f32 = pack_params(raw, matmul_dtype=jnp.float32)
    outs, h_last = policy_gradient_rollout(xs, h0, params_f32, batch_block=8)
    jax.block_until_ready((outs, h_last))
    assert outs.shape == (seq, batch, output_size) and h_last.shape == (batch, hidden_size)
    assert jnp.allclose(outs, outs_ref, atol=1e-4, rtol=1e-4)
    assert jnp.allclose(h_last, h_ref, atol=1e-4, rtol=1e-4)
    assert jnp.allclose(jnp.sum(outs, axis=-1), 1.0, atol=1e-4)

    # --- single-step forward (the module's actual forward signature) --------
    outs1, h1 = policy_gradient_forward(xs[0], h0, params_f32)
    jax.block_until_ready((outs1, h1))
    o1_ref, h1_ref = reference_step(xs[0], h0, raw)
    assert jnp.allclose(outs1, o1_ref, atol=1e-4, rtol=1e-4)
    assert jnp.allclose(h1, h1_ref, atol=1e-4, rtol=1e-4)

    # --- bf16 MXU operands (f32 accumulation): production-default path ------
    params_bf16 = pack_params(raw, matmul_dtype=jnp.bfloat16)
    outs_b, h_b = policy_gradient_rollout(xs, h0, params_bf16, batch_block=8)
    jax.block_until_ready((outs_b, h_b))
    assert jnp.allclose(outs_b, outs_ref, atol=5e-2, rtol=5e-2)
    assert jnp.allclose(h_b, h_ref, atol=5e-2, rtol=5e-2)
    assert jnp.allclose(jnp.sum(outs_b, axis=-1), 1.0, atol=1e-3)

    print("KERNEL_OK")
</pallas_src>

<mosaic_0001>
module attributes {stable_mosaic.version = 11 : i64} {
  func.func @_policy_gradient_rollout_kernel(%arg0: i32, %arg1: i32, %arg2: memref<1x8x4xf32, #tpu.memory_space<vmem>>, %arg3: memref<8x128xf32, #tpu.memory_space<vmem>>, %arg4: memref<4x384xf32, #tpu.memory_space<vmem>>, %arg5: memref<128x384xf32, #tpu.memory_space<vmem>>, %arg6: memref<1x256xf32, #tpu.memory_space<vmem>>, %arg7: memref<1x128xf32, #tpu.memory_space<vmem>>, %arg8: memref<1x128xf32, #tpu.memory_space<vmem>>, %arg9: memref<128x8xf32, #tpu.memory_space<vmem>>, %arg10: memref<1x8xf32, #tpu.memory_space<vmem>>, %arg11: memref<1x8x8xf32, #tpu.memory_space<vmem>>, %arg12: memref<8x128xf32, #tpu.memory_space<vmem>>, %arg13: memref<8x128xf32, #tpu.memory_space<vmem>>) attributes {dimension_semantics = [#tpu.dimension_semantics<parallel>, #tpu.dimension_semantics<arbitrary>], iteration_bounds = array<i64: 2, 8>, scalar_prefetch = 0 : i64, scratch_operands = 1 : i64, tpu.core_type = #tpu.core_type<tc>, window_params = [{transform_indices = @transform_0, window_bounds = array<i64: 1, 8, 4>}, {transform_indices = @transform_1, window_bounds = array<i64: 8, 128>}, {pipeline_mode = #tpu.pipeline_mode<synchronous>, transform_indices = @transform_2, window_bounds = array<i64: 4, 384>}, {pipeline_mode = #tpu.pipeline_mode<synchronous>, transform_indices = @transform_3, window_bounds = array<i64: 128, 384>}, {pipeline_mode = #tpu.pipeline_mode<synchronous>, transform_indices = @transform_4, window_bounds = array<i64: 1, 256>}, {pipeline_mode = #tpu.pipeline_mode<synchronous>, transform_indices = @transform_5, window_bounds = array<i64: 1, 128>}, {pipeline_mode = #tpu.pipeline_mode<synchronous>, transform_indices = @transform_6, window_bounds = array<i64: 1, 128>}, {pipeline_mode = #tpu.pipeline_mode<synchronous>, transform_indices = @transform_7, window_bounds = array<i64: 128, 8>}, {pipeline_mode = #tpu.pipeline_mode<synchronous>, transform_indices = @transform_8, window_bounds = array<i64: 1, 8>}, {transform_indices = @transform_9, window_bounds = array<i64: 1, 8, 8>}, {transform_indices = @transform_10, window_bounds = array<i64: 8, 128>}]} {
    %c0_i32 = arith.constant 0 : i32
    %0 = arith.cmpi eq, %arg1, %c0_i32 : i32
    %1 = arith.extui %0 : i1 to i32
    %c0_i32_0 = arith.constant 0 : i32
    %2 = arith.cmpi ne, %1, %c0_i32_0 : i32
    scf.if %2 {
      %c0_32 = arith.constant 0 : index
      %c0_33 = arith.constant 0 : index
      %58 = vector.load %arg3[%c0_32, %c0_33] : memref<8x128xf32, #tpu.memory_space<vmem>>, vector<8x128xf32>
      %c0_34 = arith.constant 0 : index
      %c0_35 = arith.constant 0 : index
      %59 = vector.load %arg13[%c0_34, %c0_35] : memref<8x128xf32, #tpu.memory_space<vmem>>, vector<8x128xf32>
      tpu.vector_store %arg13[%c0_34, %c0_35], %58 {strides = array<i32>} : memref<8x128xf32, #tpu.memory_space<vmem>>, vector<8x128xf32>,
    } else {
    }
    %c0 = arith.constant 0 : index
    %c0_1 = arith.constant 0 : index
    %3 = vector.load %arg13[%c0, %c0_1] : memref<8x128xf32, #tpu.memory_space<vmem>>, vector<8x128xf32>
    %c0_2 = arith.constant 0 : index
    %c0_3 = arith.constant 0 : index
    %c0_4 = arith.constant 0 : index
    %4 = vector.load %arg2[%c0_2, %c0_3, %c0_4] : memref<1x8x4xf32, #tpu.memory_space<vmem>>, vector<1x8x4xf32>
    %5 = vector.shape_cast %4 : vector<1x8x4xf32> to vector<8x4xf32>
    %c0_5 = arith.constant 0 : index
    %c0_6 = arith.constant 0 : index
    %6 = vector.load %arg4[%c0_5, %c0_6] : memref<4x384xf32, #tpu.memory_space<vmem>>, vector<4x384xf32>
    %cst = arith.constant dense<0.000000e+00> : vector<8x384xf32>
    %7 = tpu.matmul %5, %6, %cst {dimension_numbers = #tpu.dot_dimension_numbers<[1], [0], [0], [1], [0, 0, 1, 1], [], []>} : vector<8x4xf32>, vector<4x384xf32>, vector<8x384xf32> -> vector<8x384xf32>
    %c0_7 = arith.constant 0 : index
    %c0_8 = arith.constant 0 : index
    %8 = vector.load %arg5[%c0_7, %c0_8] : memref<128x384xf32, #tpu.memory_space<vmem>>, vector<128x384xf32>
    %cst_9 = arith.constant dense<0.000000e+00> : vector<8x384xf32>
    %9 = tpu.matmul %3, %8, %cst_9 {dimension_numbers = #tpu.dot_dimension_numbers<[1], [0], [0], [1], [0, 0, 1, 1], [], []>} : vector<8x128xf32>, vector<128x384xf32>, vector<8x384xf32> -> vector<8x384xf32>
    %10 = vector.extract_strided_slice %7 {offsets = [0, 0], sizes = [8, 256], strides = [1, 1]} : vector<8x384xf32> to vector<8x256xf32>
    %11 = vector.extract_strided_slice %9 {offsets = [0, 0], sizes = [8, 256], strides = [1, 1]} : vector<8x384xf32> to vector<8x256xf32>
    %12 = arith.addf %10, %11 : vector<8x256xf32>
    %c0_10 = arith.constant 0 : index
    %c0_11 = arith.constant 0 : index
    %13 = vector.load %arg6[%c0_10, %c0_11] : memref<1x256xf32, #tpu.memory_space<vmem>>, vector<1x256xf32>
    %14 = vector.broadcast %13 : vector<1x256xf32> to vector<8x256xf32>
    %15 = arith.addf %12, %14 : vector<8x256xf32>
    %16 = arith.negf %15 : vector<8x256xf32>
    %17 = math.exp %16 : vector<8x256xf32>
    %cst_12 = arith.constant 1.000000e+00 : f32
    %18 = vector.broadcast %cst_12 : f32 to vector<8x256xf32>
    %19 = arith.addf %18, %17 : vector<8x256xf32>
    %20 = arith.divf %18, %19 : vector<8x256xf32>
    %21 = vector.extract_strided_slice %20 {offsets = [0, 0], sizes = [8, 128], strides = [1, 1]} : vector<8x256xf32> to vector<8x128xf32>
    %22 = vector.extract_strided_slice %20 {offsets = [0, 128], sizes = [8, 128], strides = [1, 1]} : vector<8x256xf32> to vector<8x128xf32>
    %23 = vector.extract_strided_slice %7 {offsets = [0, 256], sizes = [8, 128], strides = [1, 1]} : vector<8x384xf32> to vector<8x128xf32>
    %c0_13 = arith.constant 0 : index
    %c0_14 = arith.constant 0 : index
    %24 = vector.load %arg7[%c0_13, %c0_14] : memref<1x128xf32, #tpu.memory_space<vmem>>, vector<1x128xf32>
    %25 = vector.broadcast %24 : vector<1x128xf32> to vector<8x128xf32>
    %26 = arith.addf %23, %25 : vector<8x128xf32>
    %27 = vector.extract_strided_slice %9 {offsets = [0, 256], sizes = [8, 128], strides = [1, 1]} : vector<8x384xf32> to vector<8x128xf32>
    %c0_15 = arith.constant 0 : index
    %c0_16 = arith.constant 0 : index
    %28 = vector.load %arg8[%c0_15, %c0_16] : memref<1x128xf32, #tpu.memory_space<vmem>>, vector<1x128xf32>
    %29 = vector.broadcast %28 : vector<1x128xf32> to vector<8x128xf32>
    %30 = arith.addf %27, %29 : vector<8x128xf32>
    %31 = arith.mulf %21, %30 : vector<8x128xf32>
    %32 = arith.addf %26, %31 : vector<8x128xf32>
    %33 = math.tanh %32 : vector<8x128xf32>
    %cst_17 = arith.constant 1.000000e+00 : f32
    %34 = vector.broadcast %cst_17 : f32 to vector<8x128xf32>
    %35 = arith.subf %34, %22 : vector<8x128xf32>
    %36 = arith.mulf %35, %33 : vector<8x128xf32>
    %37 = arith.mulf %22, %3 : vector<8x128xf32>
    %38 = arith.addf %36, %37 : vector<8x128xf32>
    %c0_18 = arith.constant 0 : index
    %c0_19 = arith.constant 0 : index
    %39 = vector.load %arg13[%c0_18, %c0_19] : memref<8x128xf32, #tpu.memory_space<vmem>>, vector<8x128xf32>
    tpu.vector_store %arg13[%c0_18, %c0_19], %38 {strides = array<i32>} : memref<8x128xf32, #tpu.memory_space<vmem>>, vector<8x128xf32>,
    %c0_20 = arith.constant 0 : index
    %c0_21 = arith.constant 0 : index
    %40 = vector.load %arg12[%c0_20, %c0_21] : memref<8x128xf32, #tpu.memory_space<vmem>>, vector<8x128xf32>
    tpu.vector_store %arg12[%c0_20, %c0_21], %38 {strides = array<i32>} : memref<8x128xf32, #tpu.memory_space<vmem>>, vector<8x128xf32>,
    %c0_22 = arith.constant 0 : index
    %c0_23 = arith.constant 0 : index
    %41 = vector.load %arg9[%c0_22, %c0_23] : memref<128x8xf32, #tpu.memory_space<vmem>>, vector<128x8xf32>
    %cst_24 = arith.constant dense<0.000000e+00> : vector<8x8xf32>
    %42 = tpu.matmul %38, %41, %cst_24 {dimension_numbers = #tpu.dot_dimension_numbers<[1], [0], [0], [1], [0, 0, 1, 1], [], []>} : vector<8x128xf32>, vector<128x8xf32>, vector<8x8xf32> -> vector<8x8xf32>
    %c0_25 = arith.constant 0 : index
    %c0_26 = arith.constant 0 : index
    %43 = vector.load %arg10[%c0_25, %c0_26] : memref<1x8xf32, #tpu.memory_space<vmem>>, vector<1x8xf32>
    %44 = vector.broadcast %43 : vector<1x8xf32> to vector<8x8xf32>
    %45 = arith.addf %42, %44 : vector<8x8xf32>
    %cst_27 = arith.constant dense<0xFF800000> : vector<8xf32>
    %46 = vector.multi_reduction <maximumf>, %45, %cst_27 [1] : vector<8x8xf32> to vector<8xf32>
    %47 = vector.shape_cast %46 : vector<8xf32> to vector<8x1xf32>
    %48 = vector.broadcast %47 : vector<8x1xf32> to vector<8x8xf32>
    %49 = arith.subf %45, %48 : vector<8x8xf32>
    %50 = math.exp %49 : vector<8x8xf32>
    %cst_28 = arith.constant dense<0.000000e+00> : vector<8xf32>
    %51 = vector.multi_reduction <add>, %50, %cst_28 [1] : vector<8x8xf32> to vector<8xf32>
    %52 = vector.shape_cast %51 : vector<8xf32> to vector<8x1xf32>
    %53 = vector.broadcast %52 : vector<8x1xf32> to vector<8x8xf32>
    %54 = arith.divf %50, %53 : vector<8x8xf32>
    %c0_29 = arith.constant 0 : index
    %c0_30 = arith.constant 0 : index
    %c0_31 = arith.constant 0 : index
    %55 = vector.load %arg11[%c0_29, %c0_30, %c0_31] : memref<1x8x8xf32, #tpu.memory_space<vmem>>, vector<1x8x8xf32>
    %56 = vector.shape_cast %55 : vector<1x8x8xf32> to vector<8x8xf32>
    %57 = vector.shape_cast %54 : vector<8x8xf32> to vector<1x8x8xf32>
    tpu.vector_store %arg11[%c0_29, %c0_30, %c0_31], %57 {strides = array<i32>} : memref<1x8x8xf32, #tpu.memory_space<vmem>>, vector<1x8x8xf32>,
    return
  }
  func.func @transform_0(%arg0: i32, %arg1: i32) -> (i32, i32, i32) {
    %c0_i32 = arith.constant 0 : i32
    %c0_i32_0 = arith.constant 0 : i32
    return %arg1, %arg0, %c0_i32 : i32, i32, i32
  }
  func.func @transform_1(%arg0: i32, %arg1: i32) -> (i32, i32) {
    %c0_i32 = arith.constant 0 : i32
    %c0_i32_0 = arith.constant 0 : i32
    return %arg0, %c0_i32 : i32, i32
  }
  func.func @transform_2(%arg0: i32, %arg1: i32) -> (i32, i32) {
    %c0_i32 = arith.constant 0 : i32
    %c0_i32_0 = arith.constant 0 : i32
    %c0_i32_1 = arith.constant 0 : i32
    return %c0_i32, %c0_i32_0 : i32, i32
  }
  func.func @transform_3(%arg0: i32, %arg1: i32) -> (i32, i32) {
    %c0_i32 = arith.constant 0 : i32
    %c0_i32_0 = arith.constant 0 : i32
    %c0_i32_1 = arith.constant 0 : i32
    return %c0_i32, %c0_i32_0 : i32, i32
  }
  func.func @transform_4(%arg0: i32, %arg1: i32) -> (i32, i32) {
    %c0_i32 = arith.constant 0 : i32
    %c0_i32_0 = arith.constant 0 : i32
    %c0_i32_1 = arith.constant 0 : i32
    return %c0_i32, %c0_i32_0 : i32, i32
  }
  func.func @transform_5(%arg0: i32, %arg1: i32) -> (i32, i32) {
    %c0_i32 = arith.constant 0 : i32
    %c0_i32_0 = arith.constant 0 : i32
    %c0_i32_1 = arith.constant 0 : i32
    return %c0_i32, %c0_i32_0 : i32, i32
  }
  func.func @transform_6(%arg0: i32, %arg1: i32) -> (i32, i32) {
    %c0_i32 = arith.constant 0 : i32
    %c0_i32_0 = arith.constant 0 : i32
    %c0_i32_1 = arith.constant 0 : i32
    return %c0_i32, %c0_i32_0 : i32, i32
  }
  func.func @transform_7(%arg0: i32, %arg1: i32) -> (i32, i32) {
    %c0_i32 = arith.constant 0 : i32
    %c0_i32_0 = arith.constant 0 : i32
    %c0_i32_1 = arith.constant 0 : i32
    return %c0_i32, %c0_i32_0 : i32, i32
  }
  func.func @transform_8(%arg0: i32, %arg1: i32) -> (i32, i32) {
    %c0_i32 = arith.constant 0 : i32
    %c0_i32_0 = arith.constant 0 : i32
    %c0_i32_1 = arith.constant 0 : i32
    return %c0_i32, %c0_i32_0 : i32, i32
  }
  func.func @transform_9(%arg0: i32, %arg1: i32) -> (i32, i32, i32) {
    %c0_i32 = arith.constant 0 : i32
    %c0_i32_0 = arith.constant 0 : i32
    return %arg1, %arg0, %c0_i32 : i32, i32, i32
  }
  func.func @transform_10(%arg0: i32, %arg1: i32) -> (i32, i32) {
    %c0_i32 = arith.constant 0 : i32
    %c0_i32_0 = arith.constant 0 : i32
    return %arg0, %c0_i32 : i32, i32
  }
}

</mosaic_0001>

<llo_original>
// kernel: tpu_custom_call.1
$region0: #{tpu_custom_call.1}
  #allocation0 [shape = 'u32[]', space=smem, size = 0x4, offset = 0x4, fixed_abs, tag = 'smem constant byte address 0x4 - core index']
  #allocation1 [shape = 'u32[144,128]{1,0:T(1,128)}', space=vmem, size = 0x12000, scoped, tag = 'internal scratch']
  #allocation2 [shape = 'f32[8,128]{1,0:T(8,128)}', space=vmem, size = 0x1000, scoped, tag = 'scratch operand']
  %s0 = inlined_call_operand.vmem [shape: f32[8,16,4], index: 0, kind: input, shape index: {}]
  %s1 = inlined_call_operand.vmem [shape: f32[16,128], index: 1, kind: input, shape index: {}]
  %s2 = inlined_call_operand.vmem [shape: f32[4,384], index: 2, kind: input, shape index: {}]
  %s3 = inlined_call_operand.hbm [shape: f32[128,384], index: 3, kind: input, shape index: {}]
  %s4 = inlined_call_operand.vmem [shape: f32[1,256], index: 4, kind: input, shape index: {}]
  %s5 = inlined_call_operand.vmem [shape: f32[1,128], index: 5, kind: input, shape index: {}]
  %s6 = inlined_call_operand.vmem [shape: f32[1,128], index: 6, kind: input, shape index: {}]
  %s7 = inlined_call_operand.vmem [shape: f32[128,8], index: 7, kind: input, shape index: {}]
  %s8 = inlined_call_operand.vmem [shape: f32[1,8], index: 8, kind: input, shape index: {}]
  %s9 = inlined_call_operand.vmem [shape: f32[8,16,8], index: 9, kind: output, shape index: {0}]
  %s10 = inlined_call_operand.hbm [shape: f32[16,128], index: 10, kind: output, shape index: {1}]
  %11 = xla_tuple %s9, %s10
  %s12 = sld [smem:[#allocation0]]
  $region85: #{tpu_custom_call.1} parent=0
    _
  %s14 = ssub.s32 1, %s12
  %s15 = scalar_select 0, %s14, %s12
  $region1: #{tpu_custom_call.1} parent=0
    #allocation3 [shape = 'u8[196608]{0}', space=vmem, size = 0x30000, scoped, tag = 'input window, operand 3, single buffered']
    #allocation4 [shape = 's32[2]{0}', space=sflag, size = 0x8, scoped, tag = 'scoped memory for tpu_custom_call.1']
    #allocation5 [shape = 's32[2]{0}', space=sflag, size = 0x8, scoped, tag = 'scoped memory for tpu_custom_call.1']
    #allocation6 [shape = 'u8[8192]{0}', space=vmem, size = 0x2000, scoped, tag = 'output window, operand 1']
    %16 = vsyncpa [#allocation4], 0
    %17 = vsyncpa [#allocation5], 0
    %s18 = scalar_lea.sflag [#allocation5], 1
    %19 = vsyncpa %s18, 0
    loop: start=0, step=1, limit=18
    $region2: #{tpu_custom_call.1} parent=1 // loop_pre_header
      _
    $region3: #{tpu_custom_call.1} parent=1 // loop_header
      %s21 = sphi 0, %s25
      %p22 = scmp.ge.s32.totalorder %s21, 18
      %s28 = sphi 0, %s40
      %s29 = sphi 0, %s36
      %s30 = sphi 0, %s28
      %s31 = sphi 0, %s29
      %s32 = sphi 0, %s30
      %s33 = sphi 0, %s31
      %s45 = sphi 0, %s47
      %s48 = sphi 0, %s45
      %s49 = sphi 0, %s48
      %s65 = sphi 0, %s49
      %s71 = sphi 0, %s73
      %s74 = sphi 0, %s71
      %s75 = sphi 0, %s74
      %s91 = sphi 0, %s75
      %s95 = sphi 0, %s95
      %s97 = sphi 0, %s95
      %s98 = sphi 0, %s97
      %s112 = sphi 0, %s98
      %s116 = sphi 0, %s116
      %s118 = sphi 0, %s116
      %s119 = sphi 0, %s118
      %s133 = sphi 0, %s119
      %s137 = sphi 0, %s137
      %s139 = sphi 0, %s137
      %s140 = sphi 0, %s139
      %s154 = sphi 0, %s140
      %s158 = sphi 0, %s158
      %s160 = sphi 0, %s158
      %s161 = sphi 0, %s160
      %s175 = sphi 0, %s161
      %s179 = sphi 0, %s179
      %s181 = sphi 0, %s179
      %s182 = sphi 0, %s181
      %s196 = sphi 0, %s182
      %s200 = sphi 0, %s200
      %s202 = sphi 0, %s200
      %s203 = sphi 0, %s202
      %s217 = sphi 0, %s203
      %s221 = sphi 0, %s221
      %s223 = sphi 0, %s221
      %s224 = sphi 0, %s223
      %s238 = sphi 0, %s224
      %s246 = sphi 0, %s248
      %s249 = sphi 0, %s246
      %s250 = sphi 0, %s249
      %s266 = sphi 0, %s250
      %s272 = sphi 0, %s274
      %s275 = sphi 0, %s272
      %s276 = sphi 0, %s275
      %s292 = sphi 0, %s276
    $region4: #{tpu_custom_call.1} parent=1 // loop_header_branch
      %24 = sbr.rel (%p22) target = $region8
    $region5: #{tpu_custom_call.1} parent=1 // loop_body
      %s26 = ssub.s32 %s21, 1
      %s27 = ssub.s32 %s21, 2
      %s34 = sadd.s32 1, %s29
      %p35 = scmp.ge.s32.totalorder %s34, 8
      %s36 = scalar_select %p35, 0, %s34
      %s37 = sadd.s32 1, %s28
      %s38 = scalar_select %p35, %s37, %s28
      %p39 = scmp.ge.s32.totalorder %s38, 2
      %s40 = scalar_select %p39, 0, %s38
      %s41 = ssub.s32 %s29, %s36
      %s42 = ssub.s32 %s28, %s40
      %s43 = sor.u32 %s41, %s42
      %p44 = scmp.eq.s32.totalorder %s43, 0
      %s46 = sadd.s32 %s45, 1
      %s47 = scalar_select %p44, %s45, %s46
      %p50 = pneg %p44
      %p51 = scmp.eq.s32.totalorder %s21, 15
      %p52 = por %p50, %p51
      %p53 = scmp.ne.s32.totalorder %s45, %s48
      %p54 = scmp.eq.s32.totalorder %s21, 0
      %p55 = por %p53, %p54
      %p56 = scmp.ne.s32.totalorder %s45, %s48
      %p57 = scmp.eq.s32.totalorder %s26, 15
      %p58 = por %p56, %p57
      %p59 = scmp.ne.s32.totalorder %s48, %s49
      %p60 = scmp.eq.s32.totalorder %s26, 0
      %p61 = por %p59, %p60
      %p62 = scmp.ne.s32.totalorder %s48, %s49
      %p63 = scmp.eq.s32.totalorder %s27, 15
      %p64 = por %p62, %p63
      %p66 = scmp.ne.s32.totalorder %s49, %s65
      %p67 = scmp.eq.s32.totalorder %s27, 0
      %p68 = por %p66, %p67
      %s69 = ssub.s32 %s28, %s40
      %p70 = scmp.eq.s32.totalorder %s69, 0
      %s72 = sadd.s32 %s71, 1
      %s73 = scalar_select %p70, %s71, %s72
      %p76 = pneg %p70
      %p77 = scmp.eq.s32.totalorder %s21, 15
      %p78 = por %p76, %p77
      %p79 = scmp.ne.s32.totalorder %s71, %s74
      %p80 = scmp.eq.s32.totalorder %s21, 0
      %p81 = por %p79, %p80
      %p82 = scmp.ne.s32.totalorder %s71, %s74
      %p83 = scmp.eq.s32.totalorder %s26, 15
      %p84 = por %p82, %p83
      %p85 = scmp.ne.s32.totalorder %s74, %s75
      %p86 = scmp.eq.s32.totalorder %s26, 0
      %p87 = por %p85, %p86
      %p88 = scmp.ne.s32.totalorder %s74, %s75
      %p89 = scmp.eq.s32.totalorder %s27, 15
      %p90 = por %p88, %p89
      %p92 = scmp.ne.s32.totalorder %s75, %s91
      %p93 = scmp.eq.s32.totalorder %s27, 0
      %p94 = por %p92, %p93
      %s96 = sadd.s32 %s95, 1
      %p99 = scmp.eq.s32.totalorder %s21, 15
      %p100 = scmp.ne.s32.totalorder %s95, %s97
      %p101 = scmp.eq.s32.totalorder %s21, 0
      %p102 = por %p100, %p101
      %p103 = scmp.ne.s32.totalorder %s95, %s97
      %p104 = scmp.eq.s32.totalorder %s26, 15
      %p105 = por %p103, %p104
      %p106 = scmp.ne.s32.totalorder %s97, %s98
      %p107 = scmp.eq.s32.totalorder %s26, 0
      %p108 = por %p106, %p107
      %p109 = scmp.ne.s32.totalorder %s97, %s98
      %p110 = scmp.eq.s32.totalorder %s27, 15
      %p111 = por %p109, %p110
      %p113 = scmp.ne.s32.totalorder %s98, %s112
      %p114 = scmp.eq.s32.totalorder %s27, 0
      %p115 = por %p113, %p114
      %s117 = sadd.s32 %s116, 1
      %p120 = scmp.eq.s32.totalorder %s21, 15
      %p121 = scmp.ne.s32.totalorder %s116, %s118
      %p122 = scmp.eq.s32.totalorder %s21, 0
      %p123 = por %p121, %p122
      %p124 = scmp.ne.s32.totalorder %s116, %s118
      %p125 = scmp.eq.s32.totalorder %s26, 15
      %p126 = por %p124, %p125
      %p127 = scmp.ne.s32.totalorder %s118, %s119
      %p128 = scmp.eq.s32.totalorder %s26, 0
      %p129 = por %p127, %p128
      %p130 = scmp.ne.s32.totalorder %s118, %s119
      %p131 = scmp.eq.s32.totalorder %s27, 15
      %p132 = por %p130, %p131
      %p134 = scmp.ne.s32.totalorder %s119, %s133
      %p135 = scmp.eq.s32.totalorder %s27, 0
      %p136 = por %p134, %p135
      %s138 = sadd.s32 %s137, 1
      %p141 = scmp.eq.s32.totalorder %s21, 15
      %p142 = scmp.ne.s32.totalorder %s137, %s139
      %p143 = scmp.eq.s32.totalorder %s21, 0
      %p144 = por %p142, %p143
      %p145 = scmp.ne.s32.totalorder %s137, %s139
      %p146 = scmp.eq.s32.totalorder %s26, 15
      %p147 = por %p145, %p146
      %p148 = scmp.ne.s32.totalorder %s139, %s140
      %p149 = scmp.eq.s32.totalorder %s26, 0
      %p150 = por %p148, %p149
      %p151 = scmp.ne.s32.totalorder %s139, %s140
      %p152 = scmp.eq.s32.totalorder %s27, 15
      %p153 = por %p151, %p152
      %p155 = scmp.ne.s32.totalorder %s140, %s154
      %p156 = scmp.eq.s32.totalorder %s27, 0
      %p157 = por %p155, %p156
      %s159 = sadd.s32 %s158, 1
      %p162 = scmp.eq.s32.totalorder %s21, 15
      %p163 = scmp.ne.s32.totalorder %s158, %s160
      %p164 = scmp.eq.s32.totalorder %s21, 0
      %p165 = por %p163, %p164
      %p166 = scmp.ne.s32.totalorder %s158, %s160
      %p167 = scmp.eq.s32.totalorder %s26, 15
      %p168 = por %p166, %p167
      %p169 = scmp.ne.s32.totalorder %s160, %s161
      %p170 = scmp.eq.s32.totalorder %s26, 0
      %p171 = por %p169, %p170
      %p172 = scmp.ne.s32.totalorder %s160, %s161
      %p173 = scmp.eq.s32.totalorder %s27, 15
      %p174 = por %p172, %p173
      %p176 = scmp.ne.s32.totalorder %s161, %s175
      %p177 = scmp.eq.s32.totalorder %s27, 0
      %p178 = por %p176, %p177
      %s180 = sadd.s32 %s179, 1
      %p183 = scmp.eq.s32.totalorder %s21, 15
      %p184 = scmp.ne.s32.totalorder %s179, %s181
      %p185 = scmp.eq.s32.totalorder %s21, 0
      %p186 = por %p184, %p185
      %p187 = scmp.ne.s32.totalorder %s179, %s181
      %p188 = scmp.eq.s32.totalorder %s26, 15
      %p189 = por %p187, %p188
      %p190 = scmp.ne.s32.totalorder %s181, %s182
      %p191 = scmp.eq.s32.totalorder %s26, 0
      %p192 = por %p190, %p191
      %p193 = scmp.ne.s32.totalorder %s181, %s182
      %p194 = scmp.eq.s32.totalorder %s27, 15
      %p195 = por %p193, %p194
      %p197 = scmp.ne.s32.totalorder %s182, %s196
      %p198 = scmp.eq.s32.totalorder %s27, 0
      %p199 = por %p197, %p198
      %s201 = sadd.s32 %s200, 1
      %p204 = scmp.eq.s32.totalorder %s21, 15
      %p205 = scmp.ne.s32.totalorder %s200, %s202
      %p206 = scmp.eq.s32.totalorder %s21, 0
      %p207 = por %p205, %p206
      %p208 = scmp.ne.s32.totalorder %s200, %s202
      %p209 = scmp.eq.s32.totalorder %s26, 15
      %p210 = por %p208, %p209
      %p211 = scmp.ne.s32.totalorder %s202, %s203
      %p212 = scmp.eq.s32.totalorder %s26, 0
      %p213 = por %p211, %p212
      %p214 = scmp.ne.s32.totalorder %s202, %s203
      %p215 = scmp.eq.s32.totalorder %s27, 15
      %p216 = por %p214, %p215
      %p218 = scmp.ne.s32.totalorder %s203, %s217
      %p219 = scmp.eq.s32.totalorder %s27, 0
      %p220 = por %p218, %p219
      %s222 = sadd.s32 %s221, 1
      %p225 = scmp.eq.s32.totalorder %s21, 15
      %p226 = scmp.ne.s32.totalorder %s221, %s223
      %p227 = scmp.eq.s32.totalorder %s21, 0
      %p228 = por %p226, %p227
      %p229 = scmp.ne.s32.totalorder %s221, %s223
      %p230 = scmp.eq.s32.totalorder %s26, 15
      %p231 = por %p229, %p230
      %p232 = scmp.ne.s32.totalorder %s223, %s224
      %p233 = scmp.eq.s32.totalorder %s26, 0
      %p234 = por %p232, %p233
      %p235 = scmp.ne.s32.totalorder %s223, %s224
      %p236 = scmp.eq.s32.totalorder %s27, 15
      %p237 = por %p235, %p236
      %p239 = scmp.ne.s32.totalorder %s224, %s238
      %p240 = scmp.eq.s32.totalorder %s27, 0
      %p241 = por %p239, %p240
      %s242 = ssub.s32 %s29, %s36
      %s243 = ssub.s32 %s28, %s40
      %s244 = sor.u32 %s242, %s243
      %p245 = scmp.eq.s32.totalorder %s244, 0
      %s247 = sadd.s32 %s246, 1
      %s248 = scalar_select %p245, %s246, %s247
      %p251 = pneg %p245
      %p252 = scmp.eq.s32.totalorder %s21, 15
      %p253 = por %p251, %p252
      %p254 = scmp.ne.s32.totalorder %s246, %s249
      %p255 = scmp.eq.s32.totalorder %s21, 0
      %p256 = por %p254, %p255
      %p257 = scmp.ne.s32.totalorder %s246, %s249
      %p258 = scmp.eq.s32.totalorder %s26, 15
      %p259 = por %p257, %p258
      %p260 = scmp.ne.s32.totalorder %s249, %s250
      %p261 = scmp.eq.s32.totalorder %s26, 0
      %p262 = por %p260, %p261
      %p263 = scmp.ne.s32.totalorder %s249, %s250
      %p264 = scmp.eq.s32.totalorder %s27, 15
      %p265 = por %p263, %p264
      %p267 = scmp.ne.s32.totalorder %s250, %s266
      %p268 = scmp.eq.s32.totalorder %s27, 0
      %p269 = por %p267, %p268
      %s270 = ssub.s32 %s28, %s40
      %p271 = scmp.eq.s32.totalorder %s270, 0
      %s273 = sadd.s32 %s272, 1
      %s274 = scalar_select %p271, %s272, %s273
      %p277 = pneg %p271
      %p278 = scmp.eq.s32.totalorder %s21, 15
      %p279 = por %p277, %p278
      %p280 = scmp.ne.s32.totalorder %s272, %s275
      %p281 = scmp.eq.s32.totalorder %s21, 0
      %p282 = por %p280, %p281
      %p283 = scmp.ne.s32.totalorder %s272, %s275
      %p284 = scmp.eq.s32.totalorder %s26, 15
      %p285 = por %p283, %p284
      %p286 = scmp.ne.s32.totalorder %s275, %s276
      %p287 = scmp.eq.s32.totalorder %s26, 0
      %p288 = por %p286, %p287
      %p289 = scmp.ne.s32.totalorder %s275, %s276
      %p290 = scmp.eq.s32.totalorder %s27, 15
      %p291 = por %p289, %p290
      %p293 = scmp.ne.s32.totalorder %s276, %s292
      %p294 = scmp.eq.s32.totalorder %s27, 0
      %p295 = por %p293, %p294
      %p296 = scmp.le.s32.totalorder 1, %s21
      %p297 = scmp.lt.s32.totalorder %s21, 17
      %p298 = pnand %p296, %p297
      %p299 = pneg %p298
      // Predicated region
      $region9: #{tpu_custom_call.1} parent=5 // pred_check
        _
      $region10: #{tpu_custom_call.1} parent=5 // pred_check_branch
        %301 = sbr.rel (%p298) target = $region12
      $region11: #{tpu_custom_call.1} parent=5 // pred_region
        %s302 = ssub.s32 %s21, 1
        // Predicated region
        $region13: #{tpu_custom_call.1} parent=11 // pred_check
          %p303 = pneg %p108
        $region14: #{tpu_custom_call.1} parent=11 // pred_check_branch
          %305 = sbr.rel (%p303) target = $region16
        $region15: #{tpu_custom_call.1} parent=11 // pred_region
          _
        $region16: #{tpu_custom_call.1} parent=11 // pred_fallthru
          _
        // Predicated region
        $region17: #{tpu_custom_call.1} parent=11 // pred_check
          %p306 = pneg %p129
        $region18: #{tpu_custom_call.1} parent=11 // pred_check_branch
          %308 = sbr.rel (%p306) target = $region20
        $region19: #{tpu_custom_call.1} parent=11 // pred_region
          %s310 = ssub.s32 6144, 6144
          %311 = vsyncadd [#allocation4], %s310
          %s312 = sshll.u32 [#allocation3], 4
          %s313 = int_to_ptr.vmem [resolvable:$true] %s312
          %318 = dma.hbm_to_vmem [thread:$0]  %s3, 6144, %s313, [#allocation4], 384, 384, 24
        $region20: #{tpu_custom_call.1} parent=11 // pred_fallthru
          _
        // Predicated region
        $region21: #{tpu_custom_call.1} parent=11 // pred_check
          %p319 = pneg %p150
        $region22: #{tpu_custom_call.1} parent=11 // pred_check_branch
          %321 = sbr.rel (%p319) target = $region24
        $region23: #{tpu_custom_call.1} parent=11 // pred_region
          _
        $region24: #{tpu_custom_call.1} parent=11 // pred_fallthru
          _
        // Predicated region
        $region25: #{tpu_custom_call.1} parent=11 // pred_check
          %p322 = pneg %p171
        $region26: #{tpu_custom_call.1} parent=11 // pred_check_branch
          %324 = sbr.rel (%p322) target = $region28
        $region27: #{tpu_custom_call.1} parent=11 // pred_region
          _
        $region28: #{tpu_custom_call.1} parent=11 // pred_fallthru
          _
        // Predicated region
        $region29: #{tpu_custom_call.1} parent=11 // pred_check
          %p325 = pneg %p192
        $region30: #{tpu_custom_call.1} parent=11 // pred_check_branch
          %327 = sbr.rel (%p325) target = $region32
        $region31: #{tpu_custom_call.1} parent=11 // pred_region
          _
        $region32: #{tpu_custom_call.1} parent=11 // pred_fallthru
          _
        // Predicated region
        $region33: #{tpu_custom_call.1} parent=11 // pred_check
          %p328 = pneg %p213
        $region34: #{tpu_custom_call.1} parent=11 // pred_check_branch
          %330 = sbr.rel (%p328) target = $region36
        $region35: #{tpu_custom_call.1} parent=11 // pred_region
          _
        $region36: #{tpu_custom_call.1} parent=11 // pred_fallthru
          _
        // Predicated region
        $region37: #{tpu_custom_call.1} parent=11 // pred_check
          %p331 = pneg %p234
        $region38: #{tpu_custom_call.1} parent=11 // pred_check_branch
          %333 = sbr.rel (%p331) target = $region40
        $region39: #{tpu_custom_call.1} parent=11 // pred_region
          _
        $region40: #{tpu_custom_call.1} parent=11 // pred_fallthru
          _
      $region12: #{tpu_custom_call.1} parent=5 // pred_fallthru
        _
      %p334 = scmp.lt.s32.totalorder %s21, 16
      // Predicated region
      $region41: #{tpu_custom_call.1} parent=5 // pred_check
        %p335 = pneg %p334
      $region42: #{tpu_custom_call.1} parent=5 // pred_check_branch
        %337 = sbr.rel (%p335) target = $region44
      $region43: #{tpu_custom_call.1} parent=5 // pred_region
        // Predicated region
        $region45: #{tpu_custom_call.1} parent=43 // pred_check
          %p338 = pneg %p55
        $region46: #{tpu_custom_call.1} parent=43 // pred_check_branch
          %340 = sbr.rel (%p338) target = $region48
        $region47: #{tpu_custom_call.1} parent=43 // pred_region
          %p341 = scmp.lt.s32.totalorder %s29, 7
          %s342 = scalar_select %p341, %s29, 7
          %p343 = scmp.lt.s32.totalorder %s28, 1
          %s344 = scalar_select %p343, %s28, 1
          %s345 = smul.addr %s342, 2
          %s346 = sadd.s32 %s344, %s345
          %s347 = smul.addr %s346, 8
          %s348 = scalar_lea.vmem %s0, %s347
        $region48: #{tpu_custom_call.1} parent=43 // pred_fallthru
          _
        // Predicated region
        $region49: #{tpu_custom_call.1} parent=43 // pred_check
          %p349 = pneg %p81
        $region50: #{tpu_custom_call.1} parent=43 // pred_check_branch
          %351 = sbr.rel (%p349) target = $region52
        $region51: #{tpu_custom_call.1} parent=43 // pred_region
          %p352 = scmp.lt.s32.totalorder %s28, 1
          %s353 = scalar_select %p352, %s28, 1
          %s354 = smul.addr %s353, 8
          %s355 = scalar_lea.vmem %s1, %s354
        $region52: #{tpu_custom_call.1} parent=43 // pred_fallthru
          _
      $region44: #{tpu_custom_call.1} parent=5 // pred_fallthru
        _
      %p356 = scmp.le.s32.totalorder 1, %s21
      %p357 = scmp.lt.s32.totalorder %s21, 17
      %p358 = pnand %p356, %p357
      %p359 = pneg %p358
      // Predicated region
      $region53: #{tpu_custom_call.1} parent=5 // pred_check
        _
      $region54: #{tpu_custom_call.1} parent=5 // pred_check_branch
        %361 = sbr.rel (%p358) target = $region56
      $region55: #{tpu_custom_call.1} parent=5 // pred_region
        %s362 = ssub.s32 %s21, 1
        // Predicated region
        $region57: #{tpu_custom_call.1} parent=55 // pred_check
          %p363 = pneg %p129
        $region58: #{tpu_custom_call.1} parent=55 // pred_check_branch
          %365 = sbr.rel (%p363) target = $region60
        $region59: #{tpu_custom_call.1} parent=55 // pred_region
          %366 = dma.done [#allocation4], 6144
        $region60: #{tpu_custom_call.1} parent=55 // pred_fallthru
          _
        %p367 = scmp.lt.s32.totalorder %s31, 7
        %s368 = scalar_select %p367, %s31, 7
        %p369 = scmp.lt.s32.totalorder %s30, 1
        %s370 = scalar_select %p369, %s30, 1
        %s371 = smul.addr %s368, 2
        %s372 = sadd.s32 %s370, %s371
        %s373 = smul.addr %s372, 8
        %s374 = scalar_lea.vmem %s0, %s373
        %p375 = pneg %p61
        %p376 = pneg %p58
        %p377 = scmp.lt.s32.totalorder %s30, 1
        %s378 = scalar_select %p377, %s30, 1
        %s379 = smul.addr %s378, 8
        %s380 = scalar_lea.vmem %s1, %s379
        %p381 = pneg %p87
        %p382 = pneg %p84
        %p383 = pneg %p108
        %p384 = pneg %p105
        %p385 = pneg %p129
        %p386 = pneg %p126
        %p387 = pneg %p150
        %p388 = pneg %p147
        %p389 = pneg %p171
        %p390 = pneg %p168
        %p391 = pneg %p192
        %p392 = pneg %p189
        %p393 = pneg %p213
        %p394 = pneg %p210
        %p395 = pneg %p234
        %p396 = pneg %p231
        %p397 = pneg %p262
        %p398 = pneg %p259
        %p399 = scmp.lt.s32.totalorder %s31, 7
        %s400 = scalar_select %p399, %s31, 7
        %p401 = scmp.lt.s32.totalorder %s30, 1
        %s402 = scalar_select %p401, %s30, 1
        %s403 = smul.addr %s400, 2
        %s404 = sadd.s32 %s402, %s403
        %s405 = smul.addr %s404, 8
        %s406 = scalar_lea.vmem %s9, %s405
        %p407 = pneg %p288
        %p408 = pneg %p285
        %s409 = sand.u32 %s275, 1
        %s410 = scalar_lea.sflag [#allocation5], %s409
        %s411 = sand.u32 %s275, 1
        %s412 = smul.addr %s411, 8
        %s413 = scalar_lea.vmem [#allocation6], %s412
        %p414 = scmp.lt.s32.totalorder %s31, 7
        %s415 = scalar_select %p414, %s31, 7
        %p416 = scmp.lt.s32.totalorder %s30, 1
        %s417 = scalar_select %p416, %s30, 1
        %s418 = smul.addr %s415, 2
        %s419 = sadd.s32 %s417, %s418
        %s420 = smul.addr %s419, 8
        %s421 = scalar_lea.vmem %s0, %s420
        %p422 = scmp.lt.s32.totalorder %s30, 1
        %s423 = scalar_select %p422, %s30, 1
        %s424 = smul.addr %s423, 8
        %s425 = scalar_lea.vmem %s1, %s424
        %p426 = scmp.lt.s32.totalorder %s31, 7
        %s427 = scalar_select %p426, %s31, 7
        %p428 = scmp.lt.s32.totalorder %s30, 1
        %s429 = scalar_select %p428, %s30, 1
        %s430 = smul.addr %s427, 2
        %s431 = sadd.s32 %s429, %s430
        %s432 = smul.addr %s431, 8
        %s433 = scalar_lea.vmem %s9, %s432
        %p434 = scmp.eq.s32.totalorder %s31, 0
        // Predicated region
        $region61: #{tpu_custom_call.1} parent=55 // pred_check
          %p435 = pneg %p434
        $region62: #{tpu_custom_call.1} parent=55 // pred_check_branch
          %437 = sbr.rel (%p435) target = $region64
        $region63: #{tpu_custom_call.1} parent=55 // pred_region
          %v438 = vld [vmem:[%s425] sm:$0xff]
          %439 = vst [vmem:[#allocation2] sm:$0xff] %v438
        $region64: #{tpu_custom_call.1} parent=55 // pred_fallthru
          _
        %v440 = vld [vmem:[#allocation2] sm:$0xff]
        %v441 = vld [vmem:[%s421] sm:$0xff]
        %v442 = vld [vmem:[%s2] sm:$0xff]
        %v443 = vld [vmem:[%s2 + $0x8] sm:$0xf]
        %v446 = vcombine.high %v442, %v442
        %vm447 = vcmask 31744
        %v449 = vsel %vm447, %v441, 0
        %vm451 = vcmask 1043456
        %v452 = vsel %vm451, %v442, 0
        %v454 = vsel %vm451, %v446, 0
        %v456 = vsel %vm451, %v443, 0
        %458 = vmatprep.subr.mxu0 %v454
        %459 = vmatpush1.msra.mxu0 %v452
        %460 = vmatprep.subr.mxu0 0.0
        %461 = vmatpush1.msra.mxu0 0.0
        %462 = vmatprep.subr.mxu0 0.0
        %463 = vmatpush1.msra.mxu0 0.0
        %464 = vmatprep.subr.mxu0 0.0
        %465 = vmatpush1.msra.mxu0 0.0
        %466 = vmatprep.subr.mxu0 0.0
        %467 = vmatpush1.msra.mxu0 0.0
        %468 = vmatprep.subr.mxu0 0.0
        %469 = vmatpush1.msra.mxu0 0.0
        %470 = vmatprep.subr.mxu0 0.0
        %471 = vmatpush1.msra.mxu0 0.0
        %472 = vmatprep.subr.mxu0 0.0
        %473 = vmatpush1.msra.mxu0 0.0
        %474 = vmatprep.subr.mxu0 0.0
        %475 = vmatpush1.msra.mxu0 0.0
        %476 = vmatprep.subr.mxu0 0.0
        %477 = vmatpush1.msra.mxu0 0.0
        %478 = vmatprep.subr.mxu0 0.0
        %479 = vmatpush1.msra.mxu0 0.0
        %480 = vmatprep.subr.mxu0 0.0
        %481 = vmatpush1.msra.mxu0 0.0
        %482 = vmatprep.subr.mxu0 0.0
        %483 = vmatpush1.msra.mxu0 0.0
        %484 = vmatprep.subr.mxu0 0.0
        %485 = vmatpush1.msra.mxu0 0.0
        %486 = vmatprep.subr.mxu0 0.0
        %487 = vmatpush1.msra.mxu0 0.0
        %488 = vmatprep.subr.mxu0 0.0
        %489 = vmatpush1.msra.mxu0 0.0
        %490 = vmatprep.subr.mxu0 0.0
        %491 = vmatpush1.msra.mxu0 0.0
        %492 = vmatprep.subr.mxu0 0.0
        %493 = vmatpush1.msra.mxu0 0.0
        %494 = vmatprep.subr.mxu0 0.0
        %495 = vmatpush1.msra.mxu0 0.0
        %496 = vmatprep.subr.mxu0 0.0
        %497 = vmatpush1.msra.mxu0 0.0
        %498 = vmatprep.subr.mxu0 0.0
        %499 = vmatpush1.msra.mxu0 0.0
        %500 = vmatprep.subr.mxu0 0.0
        %501 = vmatpush1.msra.mxu0 0.0
        %502 = vmatprep.subr.mxu0 0.0
        %503 = vmatpush1.msra.mxu0 0.0
        %504 = vmatprep.subr.mxu0 0.0
        %505 = vmatpush1.msra.mxu0 0.0
        %506 = vmatprep.subr.mxu0 0.0
        %507 = vmatpush1.msra.mxu0 0.0
        %508 = vmatprep.subr.mxu0 0.0
        %509 = vmatpush1.msra.mxu0 0.0
        %510 = vmatprep.subr.mxu0 0.0
        %511 = vmatpush1.msra.mxu0 0.0
        %512 = vmatprep.subr.mxu0 0.0
        %513 = vmatpush1.msra.mxu0 0.0
        %514 = vmatprep.subr.mxu0 0.0
        %515 = vmatpush1.msra.mxu0 0.0
        %516 = vmatprep.subr.mxu0 0.0
        %517 = vmatpush1.msra.mxu0 0.0
        %518 = vmatprep.subr.mxu0 0.0
        %519 = vmatpush1.msra.mxu0 0.0
        %520 = vmatprep.subr.mxu0 0.0
        %521 = vmatpush1.msra.mxu0 0.0
        %522 = vmatprep.mubr.f32.mxu0 0.0
        %523 = vmatmul.mubr.f32.gmra.mrb[0].mxu0 %v449
        %v524 = vpop.f32.mrb[0].mxu0
        %v525 = vadd.f32 0.0, %v524
        %v526 = vpop.f32.mrb[0].mxu0
        %v527 = vadd.f32 0.0, %v526
        %528 = vdwg.mxu0
        %529 = vmatprep.subr.mxu0 0.0
        %530 = vmatpush1.msra.mxu0 %v456
        %531 = vmatprep.subr.mxu0 0.0
        %532 = vmatpush1.msra.mxu0 0.0
        %533 = vmatprep.subr.mxu0 0.0
        %534 = vmatpush1.msra.mxu0 0.0
        %535 = vmatprep.subr.mxu0 0.0
        %536 = vmatpush1.msra.mxu0 0.0
        %537 = vmatprep.subr.mxu0 0.0
        %538 = vmatpush1.msra.mxu0 0.0
        %539 = vmatprep.subr.mxu0 0.0
        %540 = vmatpush1.msra.mxu0 0.0
        %541 = vmatprep.subr.mxu0 0.0
        %542 = vmatpush1.msra.mxu0 0.0
        %543 = vmatprep.subr.mxu0 0.0
        %544 = vmatpush1.msra.mxu0 0.0
        %545 = vmatprep.subr.mxu0 0.0
        %546 = vmatpush1.msra.mxu0 0.0
        %547 = vmatprep.subr.mxu0 0.0
        %548 = vmatpush1.msra.mxu0 0.0
        %549 = vmatprep.subr.mxu0 0.0
        %550 = vmatpush1.msra.mxu0 0.0
        %551 = vmatprep.subr.mxu0 0.0
        %552 = vmatpush1.msra.mxu0 0.0
        %553 = vmatprep.subr.mxu0 0.0
        %554 = vmatpush1.msra.mxu0 0.0
        %555 = vmatprep.subr.mxu0 0.0
        %556 = vmatpush1.msra.mxu0 0.0
        %557 = vmatprep.subr.mxu0 0.0
        %558 = vmatpush1.msra.mxu0 0.0
        %559 = vmatprep.subr.mxu0 0.0
        %560 = vmatpush1.msra.mxu0 0.0
        %561 = vmatprep.subr.mxu0 0.0
        %562 = vmatpush1.msra.mxu0 0.0
        %563 = vmatprep.subr.mxu0 0.0
        %564 = vmatpush1.msra.mxu0 0.0
        %565 = vmatprep.subr.mxu0 0.0
        %566 = vmatpush1.msra.mxu0 0.0
        %567 = vmatprep.subr.mxu0 0.0
        %568 = vmatpush1.msra.mxu0 0.0
        %569 = vmatprep.subr.mxu0 0.0
        %570 = vmatpush1.msra.mxu0 0.0
        %571 = vmatprep.subr.mxu0 0.0
        %572 = vmatpush1.msra.mxu0 0.0
        %573 = vmatprep.subr.mxu0 0.0
        %574 = vmatpush1.msra.mxu0 0.0
        %575 = vmatprep.subr.mxu0 0.0
        %576 = vmatpush1.msra.mxu0 0.0
        %577 = vmatprep.subr.mxu0 0.0
        %578 = vmatpush1.msra.mxu0 0.0
        %579 = vmatprep.subr.mxu0 0.0
        %580 = vmatpush1.msra.mxu0 0.0
        %581 = vmatprep.subr.mxu0 0.0
        %582 = vmatpush1.msra.mxu0 0.0
        %583 = vmatprep.subr.mxu0 0.0
        %584 = vmatpush1.msra.mxu0 0.0
        %585 = vmatprep.subr.mxu0 0.0
        %586 = vmatpush1.msra.mxu0 0.0
        %587 = vmatprep.subr.mxu0 0.0
        %588 = vmatpush1.msra.mxu0 0.0
        %589 = vmatprep.subr.mxu0 0.0
        %590 = vmatpush1.msra.mxu0 0.0
        %591 = vmatprep.subr.mxu0 0.0
        %592 = vmatpush1.msra.mxu0 0.0
        %593 = vmatprep.mubr.f32.mxu0 0.0
        %594 = vmatmul.mubr.f32.gmra.mrb[0].mxu0 %v449
        %v595 = vpop.f32.mrb[0].mxu0
        %v596 = vadd.f32 0.0, %v595
        %v597 = vpop.f32.mrb[0].mxu0
        %598 = vdwg.mxu0
        %v599 = vld [vmem:[#allocation3] sm:$0xff]
        %v600 = vld [vmem:[#allocation3 + $0x8] sm:$0xff]
        %v601 = vld [vmem:[#allocation3 + $0x10] sm:$0xff]
        %v602 = vld [vmem:[#allocation3 + $0x18] sm:$0xff]
        %v603 = vld [vmem:[#allocation3 + $0x20] sm:$0xff]
        %v604 = vld [vmem:[#allocation3 + $0x28] sm:$0xff]
        %v605 = vld [vmem:[#allocation3 + $0x30] sm:$0xff]
        %v606 = vld [vmem:[#allocation3 + $0x38] sm:$0xff]
        %v607 = vld [vmem:[#allocation3 + $0x40] sm:$0xff]
        %v608 = vld [vmem:[#allocation3 + $0x48] sm:$0xff]
        %v609 = vld [vmem:[#allocation3 + $0x50] sm:$0xff]
        %v610 = vld [vmem:[#allocation3 + $0x58] sm:$0xff]
        %v611 = vld [vmem:[#allocation3 + $0x60] sm:$0xff]
        %v612 = vld [vmem:[#allocation3 + $0x68] sm:$0xff]
        %v613 = vld [vmem:[#allocation3 + $0x70] sm:$0xff]
        %v614 = vld [vmem:[#allocation3 + $0x78] sm:$0xff]
        %v615 = vld [vmem:[#allocation3 + $0x80] sm:$0xff]
        %v616 = vld [vmem:[#allocation3 + $0x88] sm:$0xff]
        %v617 = vld [vmem:[#allocation3 + $0x90] sm:$0xff]
        %v618 = vld [vmem:[#allocation3 + $0x98] sm:$0xff]
        %v619 = vld [vmem:[#allocation3 + $0xa0] sm:$0xff]
        %v620 = vld [vmem:[#allocation3 + $0xa8] sm:$0xff]
        %v621 = vld [vmem:[#allocation3 + $0xb0] sm:$0xff]
        %v622 = vld [vmem:[#allocation3 + $0xb8] sm:$0xff]
        %v623 = vld [vmem:[#allocation3 + $0xc0] sm:$0xff]
        %v624 = vld [vmem:[#allocation3 + $0xc8] sm:$0xff]
        %v625 = vld [vmem:[#allocation3 + $0xd0] sm:$0xff]
        %v626 = vld [vmem:[#allocation3 + $0xd8] sm:$0xff]
        %v627 = vld [vmem:[#allocation3 + $0xe0] sm:$0xff]
        %v628 = vld [vmem:[#allocation3 + $0xe8] sm:$0xff]
        %v629 = vld [vmem:[#allocation3 + $0xf0] sm:$0xff]
        %v630 = vld [vmem:[#allocation3 + $0xf8] sm:$0xff]
        %v631 = vld [vmem:[#allocation3 + $0x100] sm:$0xff]
        %v632 = vld [vmem:[#allocation3 + $0x108] sm:$0xff]
        %v633 = vld [vmem:[#allocation3 + $0x110] sm:$0xff]
        %v634 = vld [vmem:[#allocation3 + $0x118] sm:$0xff]
        %v635 = vld [vmem:[#allocation3 + $0x120] sm:$0xff]
        %v636 = vld [vmem:[#allocation3 + $0x128] sm:$0xff]
        %v637 = vld [vmem:[#allocation3 + $0x130] sm:$0xff]
        %v638 = vld [vmem:[#allocation3 + $0x138] sm:$0xff]
        %v639 = vld [vmem:[#allocation3 + $0x140] sm:$0xff]
        %v640 = vld [vmem:[#allocation3 + $0x148] sm:$0xff]
        %v641 = vld [vmem:[#allocation3 + $0x150] sm:$0xff]
        %v642 = vld [vmem:[#allocation3 + $0x158] sm:$0xff]
        %v643 = vld [vmem:[#allocation3 + $0x160] sm:$0xff]
        %v644 = vld [vmem:[#allocation3 + $0x168] sm:$0xff]
        %v645 = vld [vmem:[#allocation3 + $0x170] sm:$0xff]
        %v646 = vld [vmem:[#allocation3 + $0x178] sm:$0xff]
        %647 = vmatprep.subr.mxu0 %v600
        %648 = vmatpush1.msra.mxu0 %v599
        %649 = vmatprep.subr.mxu0 %v603
        %650 = vmatpush1.msra.mxu0 %v602
        %651 = vmatprep.subr.mxu0 %v606
        %652 = vmatpush1.msra.mxu0 %v605
        %653 = vmatprep.subr.mxu0 %v609
        %654 = vmatpush1.msra.mxu0 %v608
        %655 = vmatprep.subr.mxu0 %v612
        %656 = vmatpush1.msra.mxu0 %v611
        %657 = vmatprep.subr.mxu0 %v615
        %658 = vmatpush1.msra.mxu0 %v614
        %659 = vmatprep.subr.mxu0 %v618
        %660 = vmatpush1.msra.mxu0 %v617
        %661 = vmatprep.subr.mxu0 %v621
        %662 = vmatpush1.msra.mxu0 %v620
        %663 = vmatprep.subr.mxu0 %v624
        %664 = vmatpush1.msra.mxu0 %v623
        %665 = vmatprep.subr.mxu0 %v627
        %666 = vmatpush1.msra.mxu0 %v626
        %667 = vmatprep.subr.mxu0 %v630
        %668 = vmatpush1.msra.mxu0 %v629
        %669 = vmatprep.subr.mxu0 %v633
        %670 = vmatpush1.msra.mxu0 %v632
        %671 = vmatprep.subr.mxu0 %v636
        %672 = vmatpush1.msra.mxu0 %v635
        %673 = vmatprep.subr.mxu0 %v639
        %674 = vmatpush1.msra.mxu0 %v638
        %675 = vmatprep.subr.mxu0 %v642
        %676 = vmatpush1.msra.mxu0 %v641
        %677 = vmatprep.subr.mxu0 %v645
        %678 = vmatpush1.msra.mxu0 %v644
        %679 = vmatprep.subr.mxu0 0.0
        %680 = vmatpush1.msra.mxu0 0.0
        %681 = vmatprep.subr.mxu0 0.0
        %682 = vmatpush1.msra.mxu0 0.0
        %683 = vmatprep.subr.mxu0 0.0
        %684 = vmatpush1.msra.mxu0 0.0
        %685 = vmatprep.subr.mxu0 0.0
        %686 = vmatpush1.msra.mxu0 0.0
        %687 = vmatprep.subr.mxu0 0.0
        %688 = vmatpush1.msra.mxu0 0.0
        %689 = vmatprep.subr.mxu0 0.0
        %690 = vmatpush1.msra.mxu0 0.0
        %691 = vmatprep.subr.mxu0 0.0
        %692 = vmatpush1.msra.mxu0 0.0
        %693 = vmatprep.subr.mxu0 0.0
        %694 = vmatpush1.msra.mxu0 0.0
        %695 = vmatprep.subr.mxu0 0.0
        %696 = vmatpush1.msra.mxu0 0.0
        %697 = vmatprep.subr.mxu0 0.0
        %698 = vmatpush1.msra.mxu0 0.0
        %699 = vmatprep.subr.mxu0 0.0
        %700 = vmatpush1.msra.mxu0 0.0
        %701 = vmatprep.subr.mxu0 0.0
        %702 = vmatpush1.msra.mxu0 0.0
        %703 = vmatprep.subr.mxu0 0.0
        %704 = vmatpush1.msra.mxu0 0.0
        %705 = vmatprep.subr.mxu0 0.0
        %706 = vmatpush1.msra.mxu0 0.0
        %707 = vmatprep.subr.mxu0 0.0
        %708 = vmatpush1.msra.mxu0 0.0
        %709 = vmatprep.subr.mxu0 0.0
        %710 = vmatpush1.msra.mxu0 0.0
        %711 = vmatprep.mubr.f32.mxu0 0.0
        %712 = vmatmul.mubr.f32.gmra.mrb[0].mxu0 %v440
        %v713 = vpop.f32.mrb[0].mxu0
        %v714 = vadd.f32 0.0, %v713
        %v715 = vpop.f32.mrb[0].mxu0
        %v716 = vadd.f32 0.0, %v715
        %717 = vdwg.mxu0
        %718 = vmatprep.subr.mxu0 0.0
        %719 = vmatpush1.msra.mxu0 %v601
        %720 = vmatprep.subr.mxu0 0.0
        %721 = vmatpush1.msra.mxu0 %v604
        %722 = vmatprep.subr.mxu0 0.0
        %723 = vmatpush1.msra.mxu0 %v607
        %724 = vmatprep.subr.mxu0 0.0
        %725 = vmatpush1.msra.mxu0 %v610
        %726 = vmatprep.subr.mxu0 0.0
        %727 = vmatpush1.msra.mxu0 %v613
        %728 = vmatprep.subr.mxu0 0.0
        %729 = vmatpush1.msra.mxu0 %v616
        %730 = vmatprep.subr.mxu0 0.0
        %731 = vmatpush1.msra.mxu0 %v619
        %732 = vmatprep.subr.mxu0 0.0
        %733 = vmatpush1.msra.mxu0 %v622
        %734 = vmatprep.subr.mxu0 0.0
        %735 = vmatpush1.msra.mxu0 %v625
        %736 = vmatprep.subr.mxu0 0.0
        %737 = vmatpush1.msra.mxu0 %v628
        %738 = vmatprep.subr.mxu0 0.0
        %739 = vmatpush1.msra.mxu0 %v631
        %740 = vmatprep.subr.mxu0 0.0
        %741 = vmatpush1.msra.mxu0 %v634
        %742 = vmatprep.subr.mxu0 0.0
        %743 = vmatpush1.msra.mxu0 %v637
        %744 = vmatprep.subr.mxu0 0.0
        %745 = vmatpush1.msra.mxu0 %v640
        %746 = vmatprep.subr.mxu0 0.0
        %747 = vmatpush1.msra.mxu0 %v643
        %748 = vmatprep.subr.mxu0 0.0
        %749 = vmatpush1.msra.mxu0 %v646
        %750 = vmatprep.subr.mxu0 0.0
        %751 = vmatpush1.msra.mxu0 0.0
        %752 = vmatprep.subr.mxu0 0.0
        %753 = vmatpush1.msra.mxu0 0.0
        %754 = vmatprep.subr.mxu0 0.0
        %755 = vmatpush1.msra.mxu0 0.0
        %756 = vmatprep.subr.mxu0 0.0
        %757 = vmatpush1.msra.mxu0 0.0
        %758 = vmatprep.subr.mxu0 0.0
        %759 = vmatpush1.msra.mxu0 0.0
        %760 = vmatprep.subr.mxu0 0.0
        %761 = vmatpush1.msra.mxu0 0.0
        %762 = vmatprep.subr.mxu0 0.0
        %763 = vmatpush1.msra.mxu0 0.0
        %764 = vmatprep.subr.mxu0 0.0
        %765 = vmatpush1.msra.mxu0 0.0
        %766 = vmatprep.subr.mxu0 0.0
        %767 = vmatpush1.msra.mxu0 0.0
        %768 = vmatprep.subr.mxu0 0.0
        %769 = vmatpush1.msra.mxu0 0.0
        %770 = vmatprep.subr.mxu0 0.0
        %771 = vmatpush1.msra.mxu0 0.0
        %772 = vmatprep.subr.mxu0 0.0
        %773 = vmatpush1.msra.mxu0 0.0
        %774 = vmatprep.subr.mxu0 0.0
        %775 = vmatpush1.msra.mxu0 0.0
        %776 = vmatprep.subr.mxu0 0.0
        %777 = vmatpush1.msra.mxu0 0.0
        %778 = vmatprep.subr.mxu0 0.0
        %779 = vmatpush1.msra.mxu0 0.0
        %780 = vmatprep.subr.mxu0 0.0
        %781 = vmatpush1.msra.mxu0 0.0
        %782 = vmatprep.mubr.f32.mxu0 0.0
        %783 = vmatmul.mubr.f32.gmra.mrb[0].mxu0 %v440
        %v784 = vpop.f32.mrb[0].mxu0
        %v785 = vadd.f32 0.0, %v784
        %v786 = vpop.f32.mrb[0].mxu0
        %787 = vdwg.mxu0
        %v788 = vadd.f32 %v525, %v714
        %v789 = vadd.f32 %v527, %v716
        %v790 = vld [vmem:[%s4] sm:$0x3]
        %v792 = vlaneseq
        %v793 = vshrl.u32 %v792, 7
        %v794 = vsub.s32 0, %v793
        %v795 = vrot.slane %v790, %v794
        %v796 = vlaneseq
        %v797 = vshrl.u32 %v796, 7
        %v798 = vsub.s32 1, %v797
        %v799 = vrot.slane %v790, %v798
        %v802 = vadd.f32 %v788, %v795
        %v803 = vadd.f32 %v789, %v799
        %v804 = vxor.u32 %v802, 2147483648
        %v805 = vxor.u32 %v803, 2147483648
        %v806 = vmul.f32 %v804, 1.442695
        %v807 = vpow.pop %v806
        %v808 = vmul.f32 %v805, 1.442695
        %v809 = vpow.pop %v808
        %v810 = vadd.f32 %v807, 1.0
        %v811 = vadd.f32 %v809, 1.0
        %v812 = vrcp.pop %v810
        %v813 = vmul.f32 1.0, %v812
        %v814 = vrcp.pop %v811
        %v815 = vmul.f32 1.0, %v814
        %v816 = vld [vmem:[%s5] sm:$0x1]
        %v818 = vlaneseq
        %v819 = vshrl.u32 %v818, 7
        %v820 = vsub.s32 0, %v819
        %v821 = vrot.slane %v816, %v820
        %v823 = vadd.f32 %v596, %v821
        %v824 = vld [vmem:[%s6] sm:$0x1]
        %v826 = vlaneseq
        %v827 = vshrl.u32 %v826, 7
        %v828 = vsub.s32 0, %v827
        %v829 = vrot.slane %v824, %v828
        %v831 = vadd.f32 %v785, %v829
        %v832 = vmul.f32 %v813, %v831
        %v833 = vadd.f32 %v823, %v832
        %v834 = vtanh.pop %v833
        %v835 = vsub.f32 1.0, %v815
        %v836 = vmul.f32 %v835, %v834
        %v837 = vmul.f32 %v815, %v440
        %v838 = vadd.f32 %v836, %v837
        %839 = vst [vmem:[#allocation2] sm:$0xff] %v838
        %840 = vst [vmem:[%s413] sm:$0xff] %v838
        %v841 = vld [vmem:[%s7] sm:$0xff]
        %v842 = vld [vmem:[%s7 + $0x8] sm:$0xff]
        %v843 = vld [vmem:[%s7 + $0x10] sm:$0xff]
        %v844 = vld [vmem:[%s7 + $0x18] sm:$0xff]
        %v845 = vld [vmem:[%s7 + $0x20] sm:$0xff]
        %v846 = vld [vmem:[%s7 + $0x28] sm:$0xff]
        %v847 = vld [vmem:[%s7 + $0x30] sm:$0xff]
        %v848 = vld [vmem:[%s7 + $0x38] sm:$0xff]
        %v849 = vld [vmem:[%s7 + $0x40] sm:$0xff]
        %v850 = vld [vmem:[%s7 + $0x48] sm:$0xff]
        %v851 = vld [vmem:[%s7 + $0x50] sm:$0xff]
        %v852 = vld [vmem:[%s7 + $0x58] sm:$0xff]
        %v853 = vld [vmem:[%s7 + $0x60] sm:$0xff]
        %v854 = vld [vmem:[%s7 + $0x68] sm:$0xff]
        %v855 = vld [vmem:[%s7 + $0x70] sm:$0xff]
        %v856 = vld [vmem:[%s7 + $0x78] sm:$0xff]
        %v857 = vld [vmem:[%s8] sm:$0x1]
        %v859 = vlaneseq
        %v860 = vshrl.u32 %v859, 7
        %v861 = vsub.s32 0, %v860
        %v862 = vrot.slane %v857, %v861
        %864 = vmatprep.subr.mxu0 0.0
        %865 = vmatpush1.msra.mxu0 %v841
        %866 = vmatprep.subr.mxu0 0.0
        %867 = vmatpush1.msra.mxu0 %v842
        %868 = vmatprep.subr.mxu0 0.0
        %869 = vmatpush1.msra.mxu0 %v843
        %870 = vmatprep.subr.mxu0 0.0
        %871 = vmatpush1.msra.mxu0 %v844
        %872 = vmatprep.subr.mxu0 0.0
        %873 = vmatpush1.msra.mxu0 %v845
        %874 = vmatprep.subr.mxu0 0.0
        %875 = vmatpush1.msra.mxu0 %v846
        %876 = vmatprep.subr.mxu0 0.0
        %877 = vmatpush1.msra.mxu0 %v847
        %878 = vmatprep.subr.mxu0 0.0
        %879 = vmatpush1.msra.mxu0 %v848
        %880 = vmatprep.subr.mxu0 0.0
        %881 = vmatpush1.msra.mxu0 %v849
        %882 = vmatprep.subr.mxu0 0.0
        %883 = vmatpush1.msra.mxu0 %v850
        %884 = vmatprep.subr.mxu0 0.0
        %885 = vmatpush1.msra.mxu0 %v851
        %886 = vmatprep.subr.mxu0 0.0
        %887 = vmatpush1.msra.mxu0 %v852
        %888 = vmatprep.subr.mxu0 0.0
        %889 = vmatpush1.msra.mxu0 %v853
        %890 = vmatprep.subr.mxu0 0.0
        %891 = vmatpush1.msra.mxu0 %v854
        %892 = vmatprep.subr.mxu0 0.0
        %893 = vmatpush1.msra.mxu0 %v855
        %894 = vmatprep.subr.mxu0 0.0
        %895 = vmatpush1.msra.mxu0 %v856
        %896 = vmatprep.subr.mxu0 0.0
        %897 = vmatpush1.msra.mxu0 0.0
        %898 = vmatprep.subr.mxu0 0.0
        %899 = vmatpush1.msra.mxu0 0.0
        %900 = vmatprep.subr.mxu0 0.0
        %901 = vmatpush1.msra.mxu0 0.0
        %902 = vmatprep.subr.mxu0 0.0
        %903 = vmatpush1.msra.mxu0 0.0
        %904 = vmatprep.subr.mxu0 0.0
        %905 = vmatpush1.msra.mxu0 0.0
        %906 = vmatprep.subr.mxu0 0.0
        %907 = vmatpush1.msra.mxu0 0.0
        %908 = vmatprep.subr.mxu0 0.0
        %909 = vmatpush1.msra.mxu0 0.0
        %910 = vmatprep.subr.mxu0 0.0
        %911 = vmatpush1.msra.mxu0 0.0
        %912 = vmatprep.subr.mxu0 0.0
        %913 = vmatpush1.msra.mxu0 0.0
        %914 = vmatprep.subr.mxu0 0.0
        %915 = vmatpush1.msra.mxu0 0.0
        %916 = vmatprep.subr.mxu0 0.0
        %917 = vmatpush1.msra.mxu0 0.0
        %918 = vmatprep.subr.mxu0 0.0
        %919 = vmatpush1.msra.mxu0 0.0
        %920 = vmatprep.subr.mxu0 0.0
        %921 = vmatpush1.msra.mxu0 0.0
        %922 = vmatprep.subr.mxu0 0.0
        %923 = vmatpush1.msra.mxu0 0.0
        %924 = vmatprep.subr.mxu0 0.0
        %925 = vmatpush1.msra.mxu0 0.0
        %926 = vmatprep.subr.mxu0 0.0
        %927 = vmatpush1.msra.mxu0 0.0
        %928 = vmatprep.mubr.f32.mxu0 0.0
        %929 = vmatmul.mubr.f32.gmra.mrb[0].mxu0 %v838
        %v930 = vpop.f32.mrb[0].mxu0
        %v931 = vadd.f32 %v862, %v930
        %v932 = vpop.f32.mrb[0].mxu0
        %933 = vdwg.mxu0
        %vm934 = vcmask 64512
        %v935 = vsel %vm934, %v931, -inf
        %936 = vmax.xlane.f32.xlu0 %v935
        %v937 = vpop.xlane.xlu0 %936
        %v938 = vsub.f32 %v931, %v937
        %v939 = vmul.f32 %v938, 1.442695
        %v940 = vpow.pop %v939
        %v941 = vsel %vm934, %v940, 0.0
        %942 = vadd.xlane.f32.xlu0 %v941
        %v943 = vpop.xlane.xlu0 %942
        %v944 = vrcp.pop %v943
        %v945 = vmul.f32 %v940, %v944
        %946 = vst.msk [vmem:[%s433] sm:$0xff] %vm934, %v945
        %p947 = scmp.lt.s32.totalorder %s31, 7
        %s948 = scalar_select %p947, %s31, 7
        %p949 = scmp.lt.s32.totalorder %s30, 1
        %s950 = scalar_select %p949, %s30, 1
        %s951 = smul.addr %s948, 2
        %s952 = sadd.s32 %s950, %s951
        %s953 = smul.addr %s952, 8
        %s954 = scalar_lea.vmem %s9, %s953
        %s955 = sand.u32 %s275, 1
        %s956 = scalar_lea.sflag [#allocation5], %s955
        %s957 = sand.u32 %s275, 1
        %s958 = smul.addr %s957, 8
        %s959 = scalar_lea.vmem [#allocation6], %s958
        // Predicated region
        $region65: #{tpu_custom_call.1} parent=55 // pred_check
          %p960 = pneg %p259
        $region66: #{tpu_custom_call.1} parent=55 // pred_check_branch
          %962 = sbr.rel (%p960) target = $region68
        $region67: #{tpu_custom_call.1} parent=55 // pred_region
          _
        $region68: #{tpu_custom_call.1} parent=55 // pred_fallthru
          _
        // Predicated region
        $region69: #{tpu_custom_call.1} parent=55 // pred_check
          %p963 = pneg %p285
        $region70: #{tpu_custom_call.1} parent=55 // pred_check_branch
          %965 = sbr.rel (%p963) target = $region72
        $region71: #{tpu_custom_call.1} parent=55 // pred_region
          %s967 = ssub.s32 128, 128
          %968 = vsyncadd %s956, %s967
          %s969 = smul.addr %s30, 128
          %s970 = scalar_lea.hbm %s10, %s969
          %s972 = sshll.u32 %s959, 4
          %s973 = int_to_ptr.vmem [resolvable:$true] %s972
          %975 = dma.vmem_to_hbm [thread:$0]  %s973, 128, %s970, %s956
        $region72: #{tpu_custom_call.1} parent=55 // pred_fallthru
          _
      $region56: #{tpu_custom_call.1} parent=5 // pred_fallthru
        _
      %p976 = scmp.le.s32.totalorder 2, %s21
      // Predicated region
      $region73: #{tpu_custom_call.1} parent=5 // pred_check
        %p977 = pneg %p976
      $region74: #{tpu_custom_call.1} parent=5 // pred_check_branch
        %979 = sbr.rel (%p977) target = $region76
      $region75: #{tpu_custom_call.1} parent=5 // pred_region
        %s980 = ssub.s32 %s21, 2
        // Predicated region
        $region77: #{tpu_custom_call.1} parent=75 // pred_check
          %p981 = pneg %p265
        $region78: #{tpu_custom_call.1} parent=75 // pred_check_branch
          %983 = sbr.rel (%p981) target = $region80
        $region79: #{tpu_custom_call.1} parent=75 // pred_region
          %p984 = scmp.lt.s32.totalorder %s33, 7
          %s985 = scalar_select %p984, %s33, 7
          %p986 = scmp.lt.s32.totalorder %s32, 1
          %s987 = scalar_select %p986, %s32, 1
          %s988 = smul.addr %s985, 2
          %s989 = sadd.s32 %s987, %s988
          %s990 = smul.addr %s989, 8
          %s991 = scalar_lea.vmem %s9, %s990
        $region80: #{tpu_custom_call.1} parent=75 // pred_fallthru
          _
        // Predicated region
        $region81: #{tpu_custom_call.1} parent=75 // pred_check
          %p992 = pneg %p291
        $region82: #{tpu_custom_call.1} parent=75 // pred_check_branch
          %994 = sbr.rel (%p992) target = $region84
        $region83: #{tpu_custom_call.1} parent=75 // pred_region
          %s995 = sand.u32 %s276, 1
          %s996 = scalar_lea.sflag [#allocation5], %s995
          %s997 = sand.u32 %s276, 1
          %s998 = smul.addr %s997, 8
          %s999 = scalar_lea.vmem [#allocation6], %s998
          %1000 = dma.done %s996, 128
        $region84: #{tpu_custom_call.1} parent=75 // pred_fallthru
          _
      $region76: #{tpu_custom_call.1} parent=5 // pred_fallthru
        _
    $region6: #{tpu_custom_call.1} parent=1 // loop_footer
      %s25 = sadd.s32 1, %s21
    $region7: #{tpu_custom_call.1} parent=1 // loop_footer_branch
      %20 = sbr.rel target = $region3
    $region8: #{tpu_custom_call.1} parent=1 // loop_exit
      _
    %1001 = vsyncpa [#allocation4], 1
    %s1002 = scalar_lea.sflag [#allocation4], 1
    %1003 = vsyncpa %s1002, 1
    %1004 = vsyncpa [#allocation5], 1
    %s1005 = scalar_lea.sflag [#allocation5], 1
    %1006 = vsyncpa %s1005, 1

</llo_original>
